<compile_context>
chip_gen: v7x
topology: tpu7x:2x2x1
jax: 0.10.0
libtpu: 0.0.40
codegen_flags: <defaults>
</compile_context>

<pallas_src>
import functools

import jax
import jax.numpy as jnp
from jax import lax
from jax.experimental import pallas as pl
from jax.experimental.pallas import tpu as pltpu

DROPOUT_P = 0.2
_KEEP_SCALE = 1.0 / (1.0 - DROPOUT_P)
# bits are uniform-ish over [0, 2^31); keep iff bits >= p * 2^31  =>  P(keep) = 1 - p
_KEEP_THRESH31 = int(DROPOUT_P * (1 << 31))

# Odd 32-bit mixing constants, pre-wrapped into the signed int32 range so no Python int
# handed to a jnp op ever exceeds int32.
_GOLD = -1640531527   # 0x9E3779B9
_C1 = -2048144789     # 0x85EBCA6B
_C2 = -1028477387     # 0xC2B2AE35


def _round_up(x, m):
    return ((x + m - 1) // m) * m


def _lshr(z, n):
    """Logical right shift on int32 values (mask away sign-extension bits)."""
    return (z >> n) & ((1 << (32 - n)) - 1)


def _dropout_relu(h, seed, row0, layer_salt):
    """relu(dropout(h, p)) with inverted-dropout scaling, fused into a single select.

    The row term (including seed + layer salt) and the column term are hoisted into a
    (TB, 1) and a (1, H) int32 vector; the per-element work is one broadcast add, one
    xorshift, one multiply and the threshold compare.  Mask depends only on the *global*
    row index, so tiles are decorrelated regardless of the batch tiling.
    """
    tb, hc = h.shape
    rows = lax.broadcasted_iota(jnp.int32, (tb, 1), 0) + row0
    cols = lax.broadcasted_iota(jnp.int32, (1, hc), 1)
    row_mix = rows * _C1 + (seed + layer_salt) * _GOLD     # (tb, 1), computed once per row
    col_mix = cols * _C2                                   # (1, hc), computed once per col
    z = row_mix + col_mix                                  # broadcast add
    z = z ^ _lshr(z, 15)
    z = z * _C2
    bits = z & 0x7FFFFFFF
    keep = jnp.logical_and(bits >= _KEEP_THRESH31, h > 0)
    return jnp.where(keep, h * _KEEP_SCALE, 0.0)


def mlp_dropout_kernel(seed_ref,                      # scalar-prefetch (SMEM), shape (1,)
                       x_ref, w1_ref, b1_ref,
                       w2_ref, b2_ref, w3_ref, b3_ref,
                       o_ref):
    tb = x_ref.shape[0]
    row0 = pl.program_id(0) * tb          # global row offset of this batch tile
    seed = seed_ref[0]

    # x arrives as f32 straight from HBM (no wrapper-side cast/pad pass); cast in VMEM.
    x = x_ref[...].astype(jnp.bfloat16)

    # fc1: (TB, D) @ (D, Hp) -> f32 accumulate, f32 bias
    h1 = jnp.dot(x, w1_ref[...], preferred_element_type=jnp.float32) + b1_ref[...]
    # fc2(relu(dropout(h1)))
    a1 = _dropout_relu(h1, seed, row0, layer_salt=1)
    h2 = jnp.dot(a1.astype(jnp.bfloat16), w2_ref[...],
                 preferred_element_type=jnp.float32) + b2_ref[...]
    # fc3(relu(dropout(h2)))
    a2 = _dropout_relu(h2, seed, row0, layer_salt=2)
    h3 = jnp.dot(a2.astype(jnp.bfloat16), w3_ref[...],
                 preferred_element_type=jnp.float32) + b3_ref[...]

    o_ref[...] = h3.astype(o_ref.dtype)


def _pick_batch_tile(batch):
    """Largest batch tile up to 2048 rows (multiple of 8), but keep several grid steps
    when the batch allows it, so the 'parallel' axis can shard across v7x's two
    TensorCores and the DMA pipeline has something to overlap.  Tiles never drop below
    512 rows (HBM-roofline sweet spot) unless the batch itself is smaller."""
    tb = min(2048, _round_up(batch, 8))
    if batch > 512:
        steps = min(8, pl.cdiv(batch, 512))
        tb = min(tb, max(512, _round_up(pl.cdiv(batch, steps), 8)))
    return tb


@functools.partial(jax.jit, static_argnames=("input_dim",))
def mlp_dropout_forward(x, w1, b1, w2, b2, w3, b3, seed, *, input_dim):
    # glue: same as x.view(-1, input_dim) (row-major reshape, no data movement)
    xf = x.reshape(-1, input_dim).astype(jnp.float32)
    B = xf.shape[0]
    H = w1.shape[1]
    C = w3.shape[1]

    Hp = _round_up(H, 128)   # lane-dense hidden activations
    Cp = _round_up(C, 128)   # lane-dense output (no masked partial stores)

    TB = _pick_batch_tile(B)
    grid = (pl.cdiv(B, TB),)   # ragged last tile handled by Pallas; x is NOT padded

    # Weight/bias prep (tiny, ~hundreds of KB): bf16 matmul operands, f32 biases,
    # zero-padded to Hp/Cp columns.  Padding columns stay exactly zero through
    # dropout/relu and contribute nothing to the next matmul, so semantics match.
    w1p = jnp.zeros((input_dim, Hp), jnp.bfloat16).at[:, :H].set(w1.astype(jnp.bfloat16))
    w2p = jnp.zeros((Hp, Hp), jnp.bfloat16).at[:H, :H].set(w2.astype(jnp.bfloat16))
    w3p = jnp.zeros((Hp, Cp), jnp.bfloat16).at[:H, :C].set(w3.astype(jnp.bfloat16))
    b1p = jnp.zeros((1, Hp), jnp.float32).at[:, :H].set(b1.reshape(1, H).astype(jnp.float32))
    b2p = jnp.zeros((1, Hp), jnp.float32).at[:, :H].set(b2.reshape(1, H).astype(jnp.float32))
    b3p = jnp.zeros((1, Cp), jnp.float32).at[:, :C].set(b3.reshape(1, C).astype(jnp.float32))

    seed_arr = jnp.asarray(seed, dtype=jnp.int32).reshape((1,))

    # VMEM budget: double-buffered x/out tiles + resident weights + headroom for the
    # (TB, Hp/Cp) intermediates.  Floor 32 MiB (safe on all gens, raises v5e's 16 MiB
    # default), cap 64 MiB (v7x physical).
    weight_bytes = (input_dim * Hp + Hp * Hp + Hp * Cp) * 2 + (2 * Hp + Cp) * 4
    per_step_bytes = TB * input_dim * 4 + TB * Cp * 4
    vmem_need = 2 * per_step_bytes + 2 * weight_bytes + 4 * TB * max(Hp, Cp) * 4
    vmem_limit = min(64 * 1024 * 1024, max(32 * 1024 * 1024, int(vmem_need * 5 // 4)))

    flops = 2 * B * (input_dim * Hp + Hp * Hp + Hp * Cp)
    bytes_accessed = B * input_dim * 4 + weight_bytes + B * Cp * 4

    out = pl.pallas_call(
        mlp_dropout_kernel,
        out_shape=jax.ShapeDtypeStruct((B, Cp), jnp.float32),
        grid_spec=pltpu.PrefetchScalarGridSpec(
            num_scalar_prefetch=1,
            grid=grid,
            in_specs=[
                pl.BlockSpec((TB, input_dim), lambda i, s: (i, 0)),   # x: f32, batch-tiled
                pl.BlockSpec((input_dim, Hp), lambda i, s: (0, 0)),   # w1 (VMEM-resident)
                pl.BlockSpec((1, Hp),         lambda i, s: (0, 0)),   # b1
                pl.BlockSpec((Hp, Hp),        lambda i, s: (0, 0)),   # w2
                pl.BlockSpec((1, Hp),         lambda i, s: (0, 0)),   # b2
                pl.BlockSpec((Hp, Cp),        lambda i, s: (0, 0)),   # w3 (lane-padded)
                pl.BlockSpec((1, Cp),         lambda i, s: (0, 0)),   # b3 (lane-padded)
            ],
            out_specs=pl.BlockSpec((TB, Cp), lambda i, s: (i, 0)),
        ),
        compiler_params=pltpu.CompilerParams(
            dimension_semantics=("parallel",),
            vmem_limit_bytes=vmem_limit),
        cost_estimate=pl.CostEstimate(
            flops=flops, transcendentals=0, bytes_accessed=bytes_accessed),
    )(seed_arr, xf, w1p, b1p, w2p, b2p, w3p, b3p)

    # Output kept in f32 to match the PyTorch reference; only the class-lane padding is
    # sliced off (batch axis was never padded).
    return out[:, :C]


def init_params(key, input_dim, hidden_size, num_classes):
    """Deterministic init matching nn.Linear shapes (weights stored transposed: (in, out))."""
    ks = jax.random.split(key, 6)

    def linear(kw, kb, fan_in, fan_out):
        bound = 1.0 / jnp.sqrt(fan_in)
        w = jax.random.uniform(kw, (fan_in, fan_out), jnp.float32, -bound, bound)
        b = jax.random.uniform(kb, (1, fan_out), jnp.float32, -bound, bound)
        return w, b

    w1, b1 = linear(ks[0], ks[1], input_dim, hidden_size)
    w2, b2 = linear(ks[2], ks[3], hidden_size, hidden_size)
    w3, b3 = linear(ks[4], ks[5], hidden_size, num_classes)
    return w1, b1, w2, b2, w3, b3


if __name__ == "__main__":
    # Small shapes consistent with the module: x of shape (2, 4, 16, 16) flattens to
    # (2, 1024); hidden_size=32, num_classes=10.
    batch, channels, spatial = 2, 4, 16
    input_dim = channels * spatial * spatial      # 1024
    hidden_size = 32
    num_classes = 10

    key = jax.random.PRNGKey(0)
    kx, kp = jax.random.split(key)
    x = jax.random.normal(kx, (batch, channels, spatial, spatial), jnp.float32)
    w1, b1, w2, b2, w3, b3 = init_params(kp, input_dim, hidden_size, num_classes)

    out = mlp_dropout_forward(x, w1, b1, w2, b2, w3, b3, seed=1234,
                              input_dim=input_dim)
    out = jax.block_until_ready(out)
    assert out.shape == (batch, num_classes), out.shape
    assert bool(jnp.all(jnp.isfinite(out)))
    print("KERNEL_OK")
</pallas_src>

<mosaic_0001>
module attributes {stable_mosaic.version = 11 : i64} {
  func.func @mlp_dropout_kernel(%arg0: i32, %arg1: memref<1xi32, #tpu.memory_space<smem>>, %arg2: memref<8x1024xf32, #tpu.memory_space<vmem>>, %arg3: memref<1024x128xbf16, #tpu.memory_space<vmem>>, %arg4: memref<1x128xf32, #tpu.memory_space<vmem>>, %arg5: memref<128x128xbf16, #tpu.memory_space<vmem>>, %arg6: memref<1x128xf32, #tpu.memory_space<vmem>>, %arg7: memref<128x128xbf16, #tpu.memory_space<vmem>>, %arg8: memref<1x128xf32, #tpu.memory_space<vmem>>, %arg9: memref<8x128xf32, #tpu.memory_space<vmem>>) attributes {dimension_semantics = [#tpu.dimension_semantics<parallel>], iteration_bounds = array<i64: 1>, scalar_prefetch = 1 : i64, scratch_operands = 0 : i64, tpu.core_type = #tpu.core_type<tc>, window_params = [{transform_indices = @transform_0, window_bounds = array<i64: 8, 1024>}, {pipeline_mode = #tpu.pipeline_mode<synchronous>, transform_indices = @transform_1, window_bounds = array<i64: 1024, 128>}, {pipeline_mode = #tpu.pipeline_mode<synchronous>, transform_indices = @transform_2, window_bounds = array<i64: 1, 128>}, {pipeline_mode = #tpu.pipeline_mode<synchronous>, transform_indices = @transform_3, window_bounds = array<i64: 128, 128>}, {pipeline_mode = #tpu.pipeline_mode<synchronous>, transform_indices = @transform_4, window_bounds = array<i64: 1, 128>}, {pipeline_mode = #tpu.pipeline_mode<synchronous>, transform_indices = @transform_5, window_bounds = array<i64: 128, 128>}, {pipeline_mode = #tpu.pipeline_mode<synchronous>, transform_indices = @transform_6, window_bounds = array<i64: 1, 128>}, {transform_indices = @transform_7, window_bounds = array<i64: 8, 128>}]} {
    %c8_i32 = arith.constant 8 : i32
    %0 = arith.muli %arg0, %c8_i32 : i32
    %c0 = arith.constant 0 : index
    %1 = memref.load %arg1[%c0] : memref<1xi32, #tpu.memory_space<smem>>
    %c0_0 = arith.constant 0 : index
    %c0_1 = arith.constant 0 : index
    %2 = vector.load %arg2[%c0_0, %c0_1] : memref<8x1024xf32, #tpu.memory_space<vmem>>, vector<8x1024xf32>
    %3 = arith.truncf %2 : vector<8x1024xf32> to vector<8x1024xbf16>
    %c0_2 = arith.constant 0 : index
    %c0_3 = arith.constant 0 : index
    %4 = vector.load %arg3[%c0_2, %c0_3] : memref<1024x128xbf16, #tpu.memory_space<vmem>>, vector<1024x128xbf16>
    %cst = arith.constant dense<0.000000e+00> : vector<8x128xf32>
    %5 = tpu.matmul %3, %4, %cst {dimension_numbers = #tpu.dot_dimension_numbers<[1], [0], [0], [1], [0, 0, 1, 1], [], []>} : vector<8x1024xbf16>, vector<1024x128xbf16>, vector<8x128xf32> -> vector<8x128xf32>
    %c0_4 = arith.constant 0 : index
    %c0_5 = arith.constant 0 : index
    %6 = vector.load %arg4[%c0_4, %c0_5] : memref<1x128xf32, #tpu.memory_space<vmem>>, vector<1x128xf32>
    %7 = vector.broadcast %6 : vector<1x128xf32> to vector<8x128xf32>
    %8 = arith.addf %5, %7 : vector<8x128xf32>
    %9 = tpu.iota {dimensions = array<i32: 0>} : vector<8x1xi32>
    %10 = vector.broadcast %0 : i32 to vector<8x1xi32>
    %11 = arith.addi %9, %10 : vector<8x1xi32>
    %12 = tpu.iota {dimensions = array<i32: 1>} : vector<1x128xi32>
    %c-2048144789_i32 = arith.constant -2048144789 : i32
    %13 = vector.broadcast %c-2048144789_i32 : i32 to vector<8x1xi32>
    %14 = arith.muli %11, %13 : vector<8x1xi32>
    %c1_i32 = arith.constant 1 : i32
    %15 = arith.addi %1, %c1_i32 : i32
    %c-1640531527_i32 = arith.constant -1640531527 : i32
    %16 = arith.muli %15, %c-1640531527_i32 : i32
    %17 = vector.broadcast %16 : i32 to vector<8x1xi32>
    %18 = arith.addi %14, %17 : vector<8x1xi32>
    %c-1028477387_i32 = arith.constant -1028477387 : i32
    %19 = vector.broadcast %c-1028477387_i32 : i32 to vector<1x128xi32>
    %20 = arith.muli %12, %19 : vector<1x128xi32>
    %21 = vector.broadcast %18 : vector<8x1xi32> to vector<8x128xi32>
    %22 = vector.broadcast %20 : vector<1x128xi32> to vector<8x128xi32>
    %23 = arith.addi %21, %22 : vector<8x128xi32>
    %c15_i32 = arith.constant 15 : i32
    %24 = vector.broadcast %c15_i32 : i32 to vector<8x128xi32>
    %25 = arith.shrsi %23, %24 : vector<8x128xi32>
    %c131071_i32 = arith.constant 131071 : i32
    %26 = vector.broadcast %c131071_i32 : i32 to vector<8x128xi32>
    %27 = arith.andi %25, %26 : vector<8x128xi32>
    %28 = arith.xori %23, %27 : vector<8x128xi32>
    %c-1028477387_i32_6 = arith.constant -1028477387 : i32
    %29 = vector.broadcast %c-1028477387_i32_6 : i32 to vector<8x128xi32>
    %30 = arith.muli %28, %29 : vector<8x128xi32>
    %c2147483647_i32 = arith.constant 2147483647 : i32
    %31 = vector.broadcast %c2147483647_i32 : i32 to vector<8x128xi32>
    %32 = arith.andi %30, %31 : vector<8x128xi32>
    %c429496729_i32 = arith.constant 429496729 : i32
    %33 = vector.broadcast %c429496729_i32 : i32 to vector<8x128xi32>
    %34 = arith.cmpi sge, %32, %33 : vector<8x128xi32>
    %cst_7 = arith.constant 0.000000e+00 : f32
    %35 = vector.broadcast %cst_7 : f32 to vector<8x128xf32>
    %36 = arith.cmpf ogt, %8, %35 : vector<8x128xf32>
    %37 = arith.andi %34, %36 : vector<8x128xi1>
    %cst_8 = arith.constant 1.250000e+00 : f32
    %38 = vector.broadcast %cst_8 : f32 to vector<8x128xf32>
    %39 = arith.mulf %8, %38 : vector<8x128xf32>
    %cst_9 = arith.constant 0.000000e+00 : f32
    %40 = vector.broadcast %cst_9 : f32 to vector<8x128xf32>
    %41 = arith.select %37, %39, %40 : vector<8x128xi1>, vector<8x128xf32>
    %42 = arith.truncf %41 : vector<8x128xf32> to vector<8x128xbf16>
    %c0_10 = arith.constant 0 : index
    %c0_11 = arith.constant 0 : index
    %43 = vector.load %arg5[%c0_10, %c0_11] : memref<128x128xbf16, #tpu.memory_space<vmem>>, vector<128x128xbf16>
    %cst_12 = arith.constant dense<0.000000e+00> : vector<8x128xf32>
    %44 = tpu.matmul %42, %43, %cst_12 {dimension_numbers = #tpu.dot_dimension_numbers<[1], [0], [0], [1], [0, 0, 1, 1], [], []>} : vector<8x128xbf16>, vector<128x128xbf16>, vector<8x128xf32> -> vector<8x128xf32>
    %c0_13 = arith.constant 0 : index
    %c0_14 = arith.constant 0 : index
    %45 = vector.load %arg6[%c0_13, %c0_14] : memref<1x128xf32, #tpu.memory_space<vmem>>, vector<1x128xf32>
    %46 = vector.broadcast %45 : vector<1x128xf32> to vector<8x128xf32>
    %47 = arith.addf %44, %46 : vector<8x128xf32>
    %48 = tpu.iota {dimensions = array<i32: 0>} : vector<8x1xi32>
    %49 = vector.broadcast %0 : i32 to vector<8x1xi32>
    %50 = arith.addi %48, %49 : vector<8x1xi32>
    %51 = tpu.iota {dimensions = array<i32: 1>} : vector<1x128xi32>
    %c-2048144789_i32_15 = arith.constant -2048144789 : i32
    %52 = vector.broadcast %c-2048144789_i32_15 : i32 to vector<8x1xi32>
    %53 = arith.muli %50, %52 : vector<8x1xi32>
    %c2_i32 = arith.constant 2 : i32
    %54 = arith.addi %1, %c2_i32 : i32
    %c-1640531527_i32_16 = arith.constant -1640531527 : i32
    %55 = arith.muli %54, %c-1640531527_i32_16 : i32
    %56 = vector.broadcast %55 : i32 to vector<8x1xi32>
    %57 = arith.addi %53, %56 : vector<8x1xi32>
    %c-1028477387_i32_17 = arith.constant -1028477387 : i32
    %58 = vector.broadcast %c-1028477387_i32_17 : i32 to vector<1x128xi32>
    %59 = arith.muli %51, %58 : vector<1x128xi32>
    %60 = vector.broadcast %57 : vector<8x1xi32> to vector<8x128xi32>
    %61 = vector.broadcast %59 : vector<1x128xi32> to vector<8x128xi32>
    %62 = arith.addi %60, %61 : vector<8x128xi32>
    %c15_i32_18 = arith.constant 15 : i32
    %63 = vector.broadcast %c15_i32_18 : i32 to vector<8x128xi32>
    %64 = arith.shrsi %62, %63 : vector<8x128xi32>
    %c131071_i32_19 = arith.constant 131071 : i32
    %65 = vector.broadcast %c131071_i32_19 : i32 to vector<8x128xi32>
    %66 = arith.andi %64, %65 : vector<8x128xi32>
    %67 = arith.xori %62, %66 : vector<8x128xi32>
    %c-1028477387_i32_20 = arith.constant -1028477387 : i32
    %68 = vector.broadcast %c-1028477387_i32_20 : i32 to vector<8x128xi32>
    %69 = arith.muli %67, %68 : vector<8x128xi32>
    %c2147483647_i32_21 = arith.constant 2147483647 : i32
    %70 = vector.broadcast %c2147483647_i32_21 : i32 to vector<8x128xi32>
    %71 = arith.andi %69, %70 : vector<8x128xi32>
    %c429496729_i32_22 = arith.constant 429496729 : i32
    %72 = vector.broadcast %c429496729_i32_22 : i32 to vector<8x128xi32>
    %73 = arith.cmpi sge, %71, %72 : vector<8x128xi32>
    %cst_23 = arith.constant 0.000000e+00 : f32
    %74 = vector.broadcast %cst_23 : f32 to vector<8x128xf32>
    %75 = arith.cmpf ogt, %47, %74 : vector<8x128xf32>
    %76 = arith.andi %73, %75 : vector<8x128xi1>
    %cst_24 = arith.constant 1.250000e+00 : f32
    %77 = vector.broadcast %cst_24 : f32 to vector<8x128xf32>
    %78 = arith.mulf %47, %77 : vector<8x128xf32>
    %cst_25 = arith.constant 0.000000e+00 : f32
    %79 = vector.broadcast %cst_25 : f32 to vector<8x128xf32>
    %80 = arith.select %76, %78, %79 : vector<8x128xi1>, vector<8x128xf32>
    %81 = arith.truncf %80 : vector<8x128xf32> to vector<8x128xbf16>
    %c0_26 = arith.constant 0 : index
    %c0_27 = arith.constant 0 : index
    %82 = vector.load %arg7[%c0_26, %c0_27] : memref<128x128xbf16, #tpu.memory_space<vmem>>, vector<128x128xbf16>
    %cst_28 = arith.constant dense<0.000000e+00> : vector<8x128xf32>
    %83 = tpu.matmul %81, %82, %cst_28 {dimension_numbers = #tpu.dot_dimension_numbers<[1], [0], [0], [1], [0, 0, 1, 1], [], []>} : vector<8x128xbf16>, vector<128x128xbf16>, vector<8x128xf32> -> vector<8x128xf32>
    %c0_29 = arith.constant 0 : index
    %c0_30 = arith.constant 0 : index
    %84 = vector.load %arg8[%c0_29, %c0_30] : memref<1x128xf32, #tpu.memory_space<vmem>>, vector<1x128xf32>
    %85 = vector.broadcast %84 : vector<1x128xf32> to vector<8x128xf32>
    %86 = arith.addf %83, %85 : vector<8x128xf32>
    %c0_31 = arith.constant 0 : index
    %c0_32 = arith.constant 0 : index
    %87 = vector.load %arg9[%c0_31, %c0_32] : memref<8x128xf32, #tpu.memory_space<vmem>>, vector<8x128xf32>
    tpu.vector_store %arg9[%c0_31, %c0_32], %86 {strides = array<i32>} : memref<8x128xf32, #tpu.memory_space<vmem>>, vector<8x128xf32>,
    return
  }
  func.func @transform_0(%arg0: i32, %arg1: memref<1xi32, #tpu.memory_space<smem>>) -> (i32, i32) {
    %c0_i32 = arith.constant 0 : i32
    %c0_i32_0 = arith.constant 0 : i32
    return %arg0, %c0_i32 : i32, i32
  }
  func.func @transform_1(%arg0: i32, %arg1: memref<1xi32, #tpu.memory_space<smem>>) -> (i32, i32) {
    %c0_i32 = arith.constant 0 : i32
    %c0_i32_0 = arith.constant 0 : i32
    %c0_i32_1 = arith.constant 0 : i32
    return %c0_i32, %c0_i32_0 : i32, i32
  }
  func.func @transform_2(%arg0: i32, %arg1: memref<1xi32, #tpu.memory_space<smem>>) -> (i32, i32) {
    %c0_i32 = arith.constant 0 : i32
    %c0_i32_0 = arith.constant 0 : i32
    %c0_i32_1 = arith.constant 0 : i32
    return %c0_i32, %c0_i32_0 : i32, i32
  }
  func.func @transform_3(%arg0: i32, %arg1: memref<1xi32, #tpu.memory_space<smem>>) -> (i32, i32) {
    %c0_i32 = arith.constant 0 : i32
    %c0_i32_0 = arith.constant 0 : i32
    %c0_i32_1 = arith.constant 0 : i32
    return %c0_i32, %c0_i32_0 : i32, i32
  }
  func.func @transform_4(%arg0: i32, %arg1: memref<1xi32, #tpu.memory_space<smem>>) -> (i32, i32) {
    %c0_i32 = arith.constant 0 : i32
    %c0_i32_0 = arith.constant 0 : i32
    %c0_i32_1 = arith.constant 0 : i32
    return %c0_i32, %c0_i32_0 : i32, i32
  }
  func.func @transform_5(%arg0: i32, %arg1: memref<1xi32, #tpu.memory_space<smem>>) -> (i32, i32) {
    %c0_i32 = arith.constant 0 : i32
    %c0_i32_0 = arith.constant 0 : i32
    %c0_i32_1 = arith.constant 0 : i32
    return %c0_i32, %c0_i32_0 : i32, i32
  }
  func.func @transform_6(%arg0: i32, %arg1: memref<1xi32, #tpu.memory_space<smem>>) -> (i32, i32) {
    %c0_i32 = arith.constant 0 : i32
    %c0_i32_0 = arith.constant 0 : i32
    %c0_i32_1 = arith.constant 0 : i32
    return %c0_i32, %c0_i32_0 : i32, i32
  }
  func.func @transform_7(%arg0: i32, %arg1: memref<1xi32, #tpu.memory_space<smem>>) -> (i32, i32) {
    %c0_i32 = arith.constant 0 : i32
    %c0_i32_0 = arith.constant 0 : i32
    return %arg0, %c0_i32 : i32, i32
  }
}

</mosaic_0001>

<llo_original>
// kernel: mlp_dropout_forward.1
$region0: #{mlp_dropout_forward.1}
  #allocation0 [shape = 'u32[]', space=smem, size = 0x4, offset = 0x4, fixed_abs, tag = 'smem constant byte address 0x4 - core index']
  #allocation1 [shape = 'u32[144,128]{1,0:T(1,128)}', space=vmem, size = 0x12000, scoped, tag = 'internal scratch']
  #allocation2 [shape = 's32[1]{0}', space=sflag, size = 0x4, scoped, tag = 'scoped memory for mlp_dropout_forward.1']
  #allocation3 [shape = 's32[1]{0:T(128)S(6)}', space=smem, size = 0x200, scoped, tag = 'prefetched SMEM operand 0']
  %s0 = inlined_call_operand.<no memory space> [shape: s32[1], index: 0, kind: input, shape index: {}]
  %s1 = inlined_call_operand.vmem [shape: f32[2,1024], index: 1, kind: input, shape index: {}]
  %s2 = inlined_call_operand.vmem [shape: bf16[1024,128], index: 2, kind: input, shape index: {}]
  %s3 = inlined_call_operand.vmem [shape: f32[1,128], index: 3, kind: input, shape index: {}]
  %s4 = inlined_call_operand.vmem [shape: bf16[128,128], index: 4, kind: input, shape index: {}]
  %s5 = inlined_call_operand.vmem [shape: f32[1,128], index: 5, kind: input, shape index: {}]
  %s6 = inlined_call_operand.vmem [shape: bf16[128,128], index: 6, kind: input, shape index: {}]
  %s7 = inlined_call_operand.vmem [shape: f32[1,128], index: 7, kind: input, shape index: {}]
  %s8 = inlined_call_operand.hbm [shape: f32[2,128], index: 8, kind: output, shape index: {}]
  %s9 = sld [smem:[#allocation0]]
  $region38: #{mlp_dropout_forward.1} parent=0
    _
  %s11 = ssub.s32 1, %s9
  %s12 = scalar_select 0, %s11, %s9
  %13 = sst [smem:[#allocation3]] %s0
  $region1: #{mlp_dropout_forward.1} parent=0
    #allocation4 [shape = 'u8[4096]{0}', space=vmem, size = 0x1000, scoped, tag = 'output window, operand 0, single buffered']
    #allocation5 [shape = 's32[1]{0}', space=sflag, size = 0x4, scoped, tag = 'scoped memory for mlp_dropout_forward.1']
    %14 = vsyncpa [#allocation5], 0
    // Predicated region
    $region2: #{mlp_dropout_forward.1} parent=1 // pred_check
      _
    $region3: #{mlp_dropout_forward.1} parent=1 // pred_check_branch
      %16 = sbr.rel (0) target = $region5
    $region4: #{mlp_dropout_forward.1} parent=1 // pred_region
      _
    $region5: #{mlp_dropout_forward.1} parent=1 // pred_fallthru
      _
    // Predicated region
    $region6: #{mlp_dropout_forward.1} parent=1 // pred_check
      _
    $region7: #{mlp_dropout_forward.1} parent=1 // pred_check_branch
      %18 = sbr.rel (0) target = $region9
    $region8: #{mlp_dropout_forward.1} parent=1 // pred_region
      _
    $region9: #{mlp_dropout_forward.1} parent=1 // pred_fallthru
      _
    // Predicated region
    $region10: #{mlp_dropout_forward.1} parent=1 // pred_check
      _
    $region11: #{mlp_dropout_forward.1} parent=1 // pred_check_branch
      %20 = sbr.rel (0) target = $region13
    $region12: #{mlp_dropout_forward.1} parent=1 // pred_region
      _
    $region13: #{mlp_dropout_forward.1} parent=1 // pred_fallthru
      _
    // Predicated region
    $region14: #{mlp_dropout_forward.1} parent=1 // pred_check
      _
    $region15: #{mlp_dropout_forward.1} parent=1 // pred_check_branch
      %22 = sbr.rel (0) target = $region17
    $region16: #{mlp_dropout_forward.1} parent=1 // pred_region
      _
    $region17: #{mlp_dropout_forward.1} parent=1 // pred_fallthru
      _
    // Predicated region
    $region18: #{mlp_dropout_forward.1} parent=1 // pred_check
      _
    $region19: #{mlp_dropout_forward.1} parent=1 // pred_check_branch
      %24 = sbr.rel (0) target = $region21
    $region20: #{mlp_dropout_forward.1} parent=1 // pred_region
      _
    $region21: #{mlp_dropout_forward.1} parent=1 // pred_fallthru
      _
    // Predicated region
    $region22: #{mlp_dropout_forward.1} parent=1 // pred_check
      _
    $region23: #{mlp_dropout_forward.1} parent=1 // pred_check_branch
      %26 = sbr.rel (0) target = $region25
    $region24: #{mlp_dropout_forward.1} parent=1 // pred_region
      _
    $region25: #{mlp_dropout_forward.1} parent=1 // pred_fallthru
      _
    // Predicated region
    $region26: #{mlp_dropout_forward.1} parent=1 // pred_check
      _
    $region27: #{mlp_dropout_forward.1} parent=1 // pred_check_branch
      %28 = sbr.rel (0) target = $region29
    $region28: #{mlp_dropout_forward.1} parent=1 // pred_region
      _
    $region29: #{mlp_dropout_forward.1} parent=1 // pred_fallthru
      _
    %s30 = smul.u32 0, 8
    %s31 = sld [smem:[#allocation3]]
    %v32 = vld [vmem:[%s1] sm:$0xff]
    %v33 = vld [vmem:[%s1 + $0x8] sm:$0xff]
    %v34 = vld [vmem:[%s1 + $0x10] sm:$0xff]
    %v35 = vld [vmem:[%s1 + $0x18] sm:$0xff]
    %v36 = vld [vmem:[%s1 + $0x20] sm:$0xff]
    %v37 = vld [vmem:[%s1 + $0x28] sm:$0xff]
    %v38 = vld [vmem:[%s1 + $0x30] sm:$0xff]
    %v39 = vld [vmem:[%s1 + $0x38] sm:$0xff]
    %v48 = vcombine.low %v32, %v34
    %v49 = vcombine.high %v32, %v34
    %v50 = vcombine.low %v36, %v38
    %v51 = vcombine.high %v36, %v38
    %v53 = vunpack.c.l.s4 1983009808
    %v54 = vunpack.c.0.s8 %v53
    %v55 = vlaneseq
    %v56 = vshrl.u32 %v55, 7
    %v57 = vsub.s32 %v54, %v56
    %v58 = vrot.slane %v48, %v57
    %v60 = vunpack.c.l.s4 1983009808
    %v61 = vunpack.c.0.s8 %v60
    %v62 = vlaneseq
    %v63 = vshrl.u32 %v62, 7
    %v64 = vsub.s32 %v61, %v63
    %v65 = vrot.slane %v49, %v64
    %v67 = vunpack.c.l.s4 1983009808
    %v68 = vunpack.c.0.s8 %v67
    %v69 = vlaneseq
    %v70 = vshrl.u32 %v69, 7
    %v71 = vsub.s32 %v68, %v70
    %v72 = vrot.slane %v50, %v71
    %v74 = vunpack.c.l.s4 1983009808
    %v75 = vunpack.c.0.s8 %v74
    %v76 = vlaneseq
    %v77 = vshrl.u32 %v76, 7
    %v78 = vsub.s32 %v75, %v77
    %v79 = vrot.slane %v51, %v78
    %v80 = vcombine.low %v58, %v72
    %v81 = vcombine.high %v58, %v72
    %v82 = vcombine.low %v65, %v79
    %v83 = vcombine.high %v65, %v79
    %v84 = vcombine.low %v33, %v35
    %v85 = vcombine.high %v33, %v35
    %v86 = vcombine.low %v37, %v39
    %v87 = vcombine.high %v37, %v39
    %v89 = vunpack.c.l.s4 1983009808
    %v90 = vunpack.c.0.s8 %v89
    %v91 = vlaneseq
    %v92 = vshrl.u32 %v91, 7
    %v93 = vsub.s32 %v90, %v92
    %v94 = vrot.slane %v84, %v93
    %v96 = vunpack.c.l.s4 1983009808
    %v97 = vunpack.c.0.s8 %v96
    %v98 = vlaneseq
    %v99 = vshrl.u32 %v98, 7
    %v100 = vsub.s32 %v97, %v99
    %v101 = vrot.slane %v85, %v100
    %v103 = vunpack.c.l.s4 1983009808
    %v104 = vunpack.c.0.s8 %v103
    %v105 = vlaneseq
    %v106 = vshrl.u32 %v105, 7
    %v107 = vsub.s32 %v104, %v106
    %v108 = vrot.slane %v86, %v107
    %v110 = vunpack.c.l.s4 1983009808
    %v111 = vunpack.c.0.s8 %v110
    %v112 = vlaneseq
    %v113 = vshrl.u32 %v112, 7
    %v114 = vsub.s32 %v111, %v113
    %v115 = vrot.slane %v87, %v114
    %v116 = vcombine.low %v94, %v108
    %v117 = vcombine.high %v94, %v108
    %v118 = vcombine.low %v101, %v115
    %v119 = vcombine.high %v101, %v115
    %v128 = vpack.c.bf16 %v80, %v80
    %v129 = vpack.c.bf16 %v81, %v81
    %v130 = vpack.c.bf16 %v82, %v82
    %v131 = vpack.c.bf16 %v83, %v83
    %v132 = vpack.c.bf16 %v116, %v116
    %v133 = vpack.c.bf16 %v117, %v117
    %v134 = vpack.c.bf16 %v118, %v118
    %v135 = vpack.c.bf16 %v119, %v119
    %v136 = vld [vmem:[%s2] sm:$0xf]
    %v137 = vld [vmem:[%s2 + $0x4] sm:$0xf]
    %v138 = vld [vmem:[%s2 + $0x8] sm:$0xf]
    %v139 = vld [vmem:[%s2 + $0xc] sm:$0xf]
    %v140 = vld [vmem:[%s2 + $0x10] sm:$0xf]
    %v141 = vld [vmem:[%s2 + $0x14] sm:$0xf]
    %v142 = vld [vmem:[%s2 + $0x18] sm:$0xf]
    %v143 = vld [vmem:[%s2 + $0x1c] sm:$0xf]
    %v144 = vld [vmem:[%s2 + $0x20] sm:$0xf]
    %v145 = vld [vmem:[%s2 + $0x24] sm:$0xf]
    %v146 = vld [vmem:[%s2 + $0x28] sm:$0xf]
    %v147 = vld [vmem:[%s2 + $0x2c] sm:$0xf]
    %v148 = vld [vmem:[%s2 + $0x30] sm:$0xf]
    %v149 = vld [vmem:[%s2 + $0x34] sm:$0xf]
    %v150 = vld [vmem:[%s2 + $0x38] sm:$0xf]
    %v151 = vld [vmem:[%s2 + $0x3c] sm:$0xf]
    %v152 = vld [vmem:[%s2 + $0x40] sm:$0xf]
    %v153 = vld [vmem:[%s2 + $0x44] sm:$0xf]
    %v154 = vld [vmem:[%s2 + $0x48] sm:$0xf]
    %v155 = vld [vmem:[%s2 + $0x4c] sm:$0xf]
    %v156 = vld [vmem:[%s2 + $0x50] sm:$0xf]
    %v157 = vld [vmem:[%s2 + $0x54] sm:$0xf]
    %v158 = vld [vmem:[%s2 + $0x58] sm:$0xf]
    %v159 = vld [vmem:[%s2 + $0x5c] sm:$0xf]
    %v160 = vld [vmem:[%s2 + $0x60] sm:$0xf]
    %v161 = vld [vmem:[%s2 + $0x64] sm:$0xf]
    %v162 = vld [vmem:[%s2 + $0x68] sm:$0xf]
    %v163 = vld [vmem:[%s2 + $0x6c] sm:$0xf]
    %v164 = vld [vmem:[%s2 + $0x70] sm:$0xf]
    %v165 = vld [vmem:[%s2 + $0x74] sm:$0xf]
    %v166 = vld [vmem:[%s2 + $0x78] sm:$0xf]
    %v167 = vld [vmem:[%s2 + $0x7c] sm:$0xf]
    %v168 = vld [vmem:[%s2 + $0x80] sm:$0xf]
    %v169 = vld [vmem:[%s2 + $0x84] sm:$0xf]
    %v170 = vld [vmem:[%s2 + $0x88] sm:$0xf]
    %v171 = vld [vmem:[%s2 + $0x8c] sm:$0xf]
    %v172 = vld [vmem:[%s2 + $0x90] sm:$0xf]
    %v173 = vld [vmem:[%s2 + $0x94] sm:$0xf]
    %v174 = vld [vmem:[%s2 + $0x98] sm:$0xf]
    %v175 = vld [vmem:[%s2 + $0x9c] sm:$0xf]
    %v176 = vld [vmem:[%s2 + $0xa0] sm:$0xf]
    %v177 = vld [vmem:[%s2 + $0xa4] sm:$0xf]
    %v178 = vld [vmem:[%s2 + $0xa8] sm:$0xf]
    %v179 = vld [vmem:[%s2 + $0xac] sm:$0xf]
    %v180 = vld [vmem:[%s2 + $0xb0] sm:$0xf]
    %v181 = vld [vmem:[%s2 + $0xb4] sm:$0xf]
    %v182 = vld [vmem:[%s2 + $0xb8] sm:$0xf]
    %v183 = vld [vmem:[%s2 + $0xbc] sm:$0xf]
    %v184 = vld [vmem:[%s2 + $0xc0] sm:$0xf]
    %v185 = vld [vmem:[%s2 + $0xc4] sm:$0xf]
    %v186 = vld [vmem:[%s2 + $0xc8] sm:$0xf]
    %v187 = vld [vmem:[%s2 + $0xcc] sm:$0xf]
    %v188 = vld [vmem:[%s2 + $0xd0] sm:$0xf]
    %v189 = vld [vmem:[%s2 + $0xd4] sm:$0xf]
    %v190 = vld [vmem:[%s2 + $0xd8] sm:$0xf]
    %v191 = vld [vmem:[%s2 + $0xdc] sm:$0xf]
    %v192 = vld [vmem:[%s2 + $0xe0] sm:$0xf]
    %v193 = vld [vmem:[%s2 + $0xe4] sm:$0xf]
    %v194 = vld [vmem:[%s2 + $0xe8] sm:$0xf]
    %v195 = vld [vmem:[%s2 + $0xec] sm:$0xf]
    %v196 = vld [vmem:[%s2 + $0xf0] sm:$0xf]
    %v197 = vld [vmem:[%s2 + $0xf4] sm:$0xf]
    %v198 = vld [vmem:[%s2 + $0xf8] sm:$0xf]
    %v199 = vld [vmem:[%s2 + $0xfc] sm:$0xf]
    %v200 = vld [vmem:[%s2 + $0x100] sm:$0xf]
    %v201 = vld [vmem:[%s2 + $0x104] sm:$0xf]
    %v202 = vld [vmem:[%s2 + $0x108] sm:$0xf]
    %v203 = vld [vmem:[%s2 + $0x10c] sm:$0xf]
    %v204 = vld [vmem:[%s2 + $0x110] sm:$0xf]
    %v205 = vld [vmem:[%s2 + $0x114] sm:$0xf]
    %v206 = vld [vmem:[%s2 + $0x118] sm:$0xf]
    %v207 = vld [vmem:[%s2 + $0x11c] sm:$0xf]
    %v208 = vld [vmem:[%s2 + $0x120] sm:$0xf]
    %v209 = vld [vmem:[%s2 + $0x124] sm:$0xf]
    %v210 = vld [vmem:[%s2 + $0x128] sm:$0xf]
    %v211 = vld [vmem:[%s2 + $0x12c] sm:$0xf]
    %v212 = vld [vmem:[%s2 + $0x130] sm:$0xf]
    %v213 = vld [vmem:[%s2 + $0x134] sm:$0xf]
    %v214 = vld [vmem:[%s2 + $0x138] sm:$0xf]
    %v215 = vld [vmem:[%s2 + $0x13c] sm:$0xf]
    %v216 = vld [vmem:[%s2 + $0x140] sm:$0xf]
    %v217 = vld [vmem:[%s2 + $0x144] sm:$0xf]
    %v218 = vld [vmem:[%s2 + $0x148] sm:$0xf]
    %v219 = vld [vmem:[%s2 + $0x14c] sm:$0xf]
    %v220 = vld [vmem:[%s2 + $0x150] sm:$0xf]
    %v221 = vld [vmem:[%s2 + $0x154] sm:$0xf]
    %v222 = vld [vmem:[%s2 + $0x158] sm:$0xf]
    %v223 = vld [vmem:[%s2 + $0x15c] sm:$0xf]
    %v224 = vld [vmem:[%s2 + $0x160] sm:$0xf]
    %v225 = vld [vmem:[%s2 + $0x164] sm:$0xf]
    %v226 = vld [vmem:[%s2 + $0x168] sm:$0xf]
    %v227 = vld [vmem:[%s2 + $0x16c] sm:$0xf]
    %v228 = vld [vmem:[%s2 + $0x170] sm:$0xf]
    %v229 = vld [vmem:[%s2 + $0x174] sm:$0xf]
    %v230 = vld [vmem:[%s2 + $0x178] sm:$0xf]
    %v231 = vld [vmem:[%s2 + $0x17c] sm:$0xf]
    %v232 = vld [vmem:[%s2 + $0x180] sm:$0xf]
    %v233 = vld [vmem:[%s2 + $0x184] sm:$0xf]
    %v234 = vld [vmem:[%s2 + $0x188] sm:$0xf]
    %v235 = vld [vmem:[%s2 + $0x18c] sm:$0xf]
    %v236 = vld [vmem:[%s2 + $0x190] sm:$0xf]
    %v237 = vld [vmem:[%s2 + $0x194] sm:$0xf]
    %v238 = vld [vmem:[%s2 + $0x198] sm:$0xf]
    %v239 = vld [vmem:[%s2 + $0x19c] sm:$0xf]
    %v240 = vld [vmem:[%s2 + $0x1a0] sm:$0xf]
    %v241 = vld [vmem:[%s2 + $0x1a4] sm:$0xf]
    %v242 = vld [vmem:[%s2 + $0x1a8] sm:$0xf]
    %v243 = vld [vmem:[%s2 + $0x1ac] sm:$0xf]
    %v244 = vld [vmem:[%s2 + $0x1b0] sm:$0xf]
    %v245 = vld [vmem:[%s2 + $0x1b4] sm:$0xf]
    %v246 = vld [vmem:[%s2 + $0x1b8] sm:$0xf]
    %v247 = vld [vmem:[%s2 + $0x1bc] sm:$0xf]
    %v248 = vld [vmem:[%s2 + $0x1c0] sm:$0xf]
    %v249 = vld [vmem:[%s2 + $0x1c4] sm:$0xf]
    %v250 = vld [vmem:[%s2 + $0x1c8] sm:$0xf]
    %v251 = vld [vmem:[%s2 + $0x1cc] sm:$0xf]
    %v252 = vld [vmem:[%s2 + $0x1d0] sm:$0xf]
    %v253 = vld [vmem:[%s2 + $0x1d4] sm:$0xf]
    %v254 = vld [vmem:[%s2 + $0x1d8] sm:$0xf]
    %v255 = vld [vmem:[%s2 + $0x1dc] sm:$0xf]
    %v256 = vld [vmem:[%s2 + $0x1e0] sm:$0xf]
    %v257 = vld [vmem:[%s2 + $0x1e4] sm:$0xf]
    %v258 = vld [vmem:[%s2 + $0x1e8] sm:$0xf]
    %v259 = vld [vmem:[%s2 + $0x1ec] sm:$0xf]
    %v260 = vld [vmem:[%s2 + $0x1f0] sm:$0xf]
    %v261 = vld [vmem:[%s2 + $0x1f4] sm:$0xf]
    %v262 = vld [vmem:[%s2 + $0x1f8] sm:$0xf]
    %v263 = vld [vmem:[%s2 + $0x1fc] sm:$0xf]
    %v264 = vld [vmem:[%s3] sm:$0x1]
    %v266 = vlaneseq
    %v267 = vshrl.u32 %v266, 7
    %v268 = vsub.s32 0, %v267
    %v269 = vrot.slane %v264, %v268
    %v399 = vunpack.c.l.b16 %v136
    %v400 = vunpack.c.l.b16 %v137
    %v401 = vunpack.c.l.b16 %v138
    %v402 = vunpack.c.l.b16 %v139
    %v403 = vunpack.c.l.b16 %v140
    %v404 = vunpack.c.l.b16 %v141
    %v405 = vunpack.c.l.b16 %v142
    %v406 = vunpack.c.l.b16 %v143
    %v407 = vunpack.c.l.b16 %v144
    %v408 = vunpack.c.l.b16 %v145
    %v409 = vunpack.c.l.b16 %v146
    %v410 = vunpack.c.l.b16 %v147
    %v411 = vunpack.c.l.b16 %v148
    %v412 = vunpack.c.l.b16 %v149
    %v413 = vunpack.c.l.b16 %v150
    %v414 = vunpack.c.l.b16 %v151
    %v415 = vunpack.c.l.b16 %v152
    %v416 = vunpack.c.l.b16 %v153
    %v417 = vunpack.c.l.b16 %v154
    %v418 = vunpack.c.l.b16 %v155
    %v419 = vunpack.c.l.b16 %v156
    %v420 = vunpack.c.l.b16 %v157
    %v421 = vunpack.c.l.b16 %v158
    %v422 = vunpack.c.l.b16 %v159
    %v423 = vunpack.c.l.b16 %v160
    %v424 = vunpack.c.l.b16 %v161
    %v425 = vunpack.c.l.b16 %v162
    %v426 = vunpack.c.l.b16 %v163
    %v427 = vunpack.c.l.b16 %v164
    %v428 = vunpack.c.l.b16 %v165
    %v429 = vunpack.c.l.b16 %v166
    %v430 = vunpack.c.l.b16 %v167
    %v431 = vunpack.c.l.b16 %v168
    %v432 = vunpack.c.l.b16 %v169
    %v433 = vunpack.c.l.b16 %v170
    %v434 = vunpack.c.l.b16 %v171
    %v435 = vunpack.c.l.b16 %v172
    %v436 = vunpack.c.l.b16 %v173
    %v437 = vunpack.c.l.b16 %v174
    %v438 = vunpack.c.l.b16 %v175
    %v439 = vunpack.c.l.b16 %v176
    %v440 = vunpack.c.l.b16 %v177
    %v441 = vunpack.c.l.b16 %v178
    %v442 = vunpack.c.l.b16 %v179
    %v443 = vunpack.c.l.b16 %v180
    %v444 = vunpack.c.l.b16 %v181
    %v445 = vunpack.c.l.b16 %v182
    %v446 = vunpack.c.l.b16 %v183
    %v447 = vunpack.c.l.b16 %v184
    %v448 = vunpack.c.l.b16 %v185
    %v449 = vunpack.c.l.b16 %v186
    %v450 = vunpack.c.l.b16 %v187
    %v451 = vunpack.c.l.b16 %v188
    %v452 = vunpack.c.l.b16 %v189
    %v453 = vunpack.c.l.b16 %v190
    %v454 = vunpack.c.l.b16 %v191
    %v455 = vunpack.c.l.b16 %v192
    %v456 = vunpack.c.l.b16 %v193
    %v457 = vunpack.c.l.b16 %v194
    %v458 = vunpack.c.l.b16 %v195
    %v459 = vunpack.c.l.b16 %v196
    %v460 = vunpack.c.l.b16 %v197
    %v461 = vunpack.c.l.b16 %v198
    %v462 = vunpack.c.l.b16 %v199
    %v463 = vunpack.c.l.b16 %v200
    %v464 = vunpack.c.l.b16 %v201
    %v465 = vunpack.c.l.b16 %v202
    %v466 = vunpack.c.l.b16 %v203
    %v467 = vunpack.c.l.b16 %v204
    %v468 = vunpack.c.l.b16 %v205
    %v469 = vunpack.c.l.b16 %v206
    %v470 = vunpack.c.l.b16 %v207
    %v471 = vunpack.c.l.b16 %v208
    %v472 = vunpack.c.l.b16 %v209
    %v473 = vunpack.c.l.b16 %v210
    %v474 = vunpack.c.l.b16 %v211
    %v475 = vunpack.c.l.b16 %v212
    %v476 = vunpack.c.l.b16 %v213
    %v477 = vunpack.c.l.b16 %v214
    %v478 = vunpack.c.l.b16 %v215
    %v479 = vunpack.c.l.b16 %v216
    %v480 = vunpack.c.l.b16 %v217
    %v481 = vunpack.c.l.b16 %v218
    %v482 = vunpack.c.l.b16 %v219
    %v483 = vunpack.c.l.b16 %v220
    %v484 = vunpack.c.l.b16 %v221
    %v485 = vunpack.c.l.b16 %v222
    %v486 = vunpack.c.l.b16 %v223
    %v487 = vunpack.c.l.b16 %v224
    %v488 = vunpack.c.l.b16 %v225
    %v489 = vunpack.c.l.b16 %v226
    %v490 = vunpack.c.l.b16 %v227
    %v491 = vunpack.c.l.b16 %v228
    %v492 = vunpack.c.l.b16 %v229
    %v493 = vunpack.c.l.b16 %v230
    %v494 = vunpack.c.l.b16 %v231
    %v495 = vunpack.c.l.b16 %v232
    %v496 = vunpack.c.l.b16 %v233
    %v497 = vunpack.c.l.b16 %v234
    %v498 = vunpack.c.l.b16 %v235
    %v499 = vunpack.c.l.b16 %v236
    %v500 = vunpack.c.l.b16 %v237
    %v501 = vunpack.c.l.b16 %v238
    %v502 = vunpack.c.l.b16 %v239
    %v503 = vunpack.c.l.b16 %v240
    %v504 = vunpack.c.l.b16 %v241
    %v505 = vunpack.c.l.b16 %v242
    %v506 = vunpack.c.l.b16 %v243
    %v507 = vunpack.c.l.b16 %v244
    %v508 = vunpack.c.l.b16 %v245
    %v509 = vunpack.c.l.b16 %v246
    %v510 = vunpack.c.l.b16 %v247
    %v511 = vunpack.c.l.b16 %v248
    %v512 = vunpack.c.l.b16 %v249
    %v513 = vunpack.c.l.b16 %v250
    %v514 = vunpack.c.l.b16 %v251
    %v515 = vunpack.c.l.b16 %v252
    %v516 = vunpack.c.l.b16 %v253
    %v517 = vunpack.c.l.b16 %v254
    %v518 = vunpack.c.l.b16 %v255
    %v519 = vunpack.c.l.b16 %v256
    %v520 = vunpack.c.l.b16 %v257
    %v521 = vunpack.c.l.b16 %v258
    %v522 = vunpack.c.l.b16 %v259
    %v523 = vunpack.c.l.b16 %v260
    %v524 = vunpack.c.l.b16 %v261
    %v525 = vunpack.c.l.b16 %v262
    %v526 = vunpack.c.l.b16 %v263
    %v527 = vpack.c.b16 %v400, %v399
    %v528 = vpack.c.b16 %v402, %v401
    %v529 = vpack.c.b16 %v404, %v403
    %v530 = vpack.c.b16 %v406, %v405
    %v531 = vpack.c.b16 %v408, %v407
    %v532 = vpack.c.b16 %v410, %v409
    %v533 = vpack.c.b16 %v412, %v411
    %v534 = vpack.c.b16 %v414, %v413
    %v535 = vpack.c.b16 %v416, %v415
    %v536 = vpack.c.b16 %v418, %v417
    %v537 = vpack.c.b16 %v420, %v419
    %v538 = vpack.c.b16 %v422, %v421
    %v539 = vpack.c.b16 %v424, %v423
    %v540 = vpack.c.b16 %v426, %v425
    %v541 = vpack.c.b16 %v428, %v427
    %v542 = vpack.c.b16 %v430, %v429
    %v543 = vpack.c.b16 %v432, %v431
    %v544 = vpack.c.b16 %v434, %v433
    %v545 = vpack.c.b16 %v436, %v435
    %v546 = vpack.c.b16 %v438, %v437
    %v547 = vpack.c.b16 %v440, %v439
    %v548 = vpack.c.b16 %v442, %v441
    %v549 = vpack.c.b16 %v444, %v443
    %v550 = vpack.c.b16 %v446, %v445
    %v551 = vpack.c.b16 %v448, %v447
    %v552 = vpack.c.b16 %v450, %v449
    %v553 = vpack.c.b16 %v452, %v451
    %v554 = vpack.c.b16 %v454, %v453
    %v555 = vpack.c.b16 %v456, %v455
    %v556 = vpack.c.b16 %v458, %v457
    %v557 = vpack.c.b16 %v460, %v459
    %v558 = vpack.c.b16 %v462, %v461
    %v559 = vpack.c.b16 %v464, %v463
    %v560 = vpack.c.b16 %v466, %v465
    %v561 = vpack.c.b16 %v468, %v467
    %v562 = vpack.c.b16 %v470, %v469
    %v563 = vpack.c.b16 %v472, %v471
    %v564 = vpack.c.b16 %v474, %v473
    %v565 = vpack.c.b16 %v476, %v475
    %v566 = vpack.c.b16 %v478, %v477
    %v567 = vpack.c.b16 %v480, %v479
    %v568 = vpack.c.b16 %v482, %v481
    %v569 = vpack.c.b16 %v484, %v483
    %v570 = vpack.c.b16 %v486, %v485
    %v571 = vpack.c.b16 %v488, %v487
    %v572 = vpack.c.b16 %v490, %v489
    %v573 = vpack.c.b16 %v492, %v491
    %v574 = vpack.c.b16 %v494, %v493
    %v575 = vpack.c.b16 %v496, %v495
    %v576 = vpack.c.b16 %v498, %v497
    %v577 = vpack.c.b16 %v500, %v499
    %v578 = vpack.c.b16 %v502, %v501
    %v579 = vpack.c.b16 %v504, %v503
    %v580 = vpack.c.b16 %v506, %v505
    %v581 = vpack.c.b16 %v508, %v507
    %v582 = vpack.c.b16 %v510, %v509
    %v583 = vpack.c.b16 %v512, %v511
    %v584 = vpack.c.b16 %v514, %v513
    %v585 = vpack.c.b16 %v516, %v515
    %v586 = vpack.c.b16 %v518, %v517
    %v587 = vpack.c.b16 %v520, %v519
    %v588 = vpack.c.b16 %v522, %v521
    %v589 = vpack.c.b16 %v524, %v523
    %v590 = vpack.c.b16 %v526, %v525
    %655 = vmatprep.subr.bf16.mxu0 0
    %656 = vmatpush1.bf16.msra.mxu0 %v527
    %657 = vmatprep.subr.bf16.mxu0 0
    %658 = vmatpush1.bf16.msra.mxu0 %v528
    %659 = vmatprep.subr.bf16.mxu0 0
    %660 = vmatpush1.bf16.msra.mxu0 %v529
    %661 = vmatprep.subr.bf16.mxu0 0
    %662 = vmatpush1.bf16.msra.mxu0 %v530
    %663 = vmatprep.subr.bf16.mxu0 0
    %664 = vmatpush1.bf16.msra.mxu0 %v531
    %665 = vmatprep.subr.bf16.mxu0 0
    %666 = vmatpush1.bf16.msra.mxu0 %v532
    %667 = vmatprep.subr.bf16.mxu0 0
    %668 = vmatpush1.bf16.msra.mxu0 %v533
    %669 = vmatprep.subr.bf16.mxu0 0
    %670 = vmatpush1.bf16.msra.mxu0 %v534
    %671 = vmatprep.subr.bf16.mxu0 0
    %672 = vmatpush1.bf16.msra.mxu0 %v535
    %673 = vmatprep.subr.bf16.mxu0 0
    %674 = vmatpush1.bf16.msra.mxu0 %v536
    %675 = vmatprep.subr.bf16.mxu0 0
    %676 = vmatpush1.bf16.msra.mxu0 %v537
    %677 = vmatprep.subr.bf16.mxu0 0
    %678 = vmatpush1.bf16.msra.mxu0 %v538
    %679 = vmatprep.subr.bf16.mxu0 0
    %680 = vmatpush1.bf16.msra.mxu0 %v539
    %681 = vmatprep.subr.bf16.mxu0 0
    %682 = vmatpush1.bf16.msra.mxu0 %v540
    %683 = vmatprep.subr.bf16.mxu0 0
    %684 = vmatpush1.bf16.msra.mxu0 %v541
    %685 = vmatprep.subr.bf16.mxu0 0
    %686 = vmatpush1.bf16.msra.mxu0 %v542
    %687 = vmatprep.mubr.bf16.mxu0 %v129
    %688 = vmatmul.mubr.bf16.gmra.mrb[0].mxu0 %v128
    %v689 = vpop.f32.mrb[0].mxu0
    %v690 = vadd.f32 %v269, %v689
    %v691 = vpop.f32.mrb[0].mxu0
    %v692 = vpop.f32.mrb[0].mxu0
    %v693 = vpop.f32.mrb[0].mxu0
    %694 = vdwg.mxu0
    %695 = vmatprep.subr.bf16.mxu0 0
    %696 = vmatpush1.bf16.msra.mxu0 %v543
    %697 = vmatprep.subr.bf16.mxu0 0
    %698 = vmatpush1.bf16.msra.mxu0 %v544
    %699 = vmatprep.subr.bf16.mxu0 0
    %700 = vmatpush1.bf16.msra.mxu0 %v545
    %701 = vmatprep.subr.bf16.mxu0 0
    %702 = vmatpush1.bf16.msra.mxu0 %v546
    %703 = vmatprep.subr.bf16.mxu0 0
    %704 = vmatpush1.bf16.msra.mxu0 %v547
    %705 = vmatprep.subr.bf16.mxu0 0
    %706 = vmatpush1.bf16.msra.mxu0 %v548
    %707 = vmatprep.subr.bf16.mxu0 0
    %708 = vmatpush1.bf16.msra.mxu0 %v549
    %709 = vmatprep.subr.bf16.mxu0 0
    %710 = vmatpush1.bf16.msra.mxu0 %v550
    %711 = vmatprep.subr.bf16.mxu0 0
    %712 = vmatpush1.bf16.msra.mxu0 %v551
    %713 = vmatprep.subr.bf16.mxu0 0
    %714 = vmatpush1.bf16.msra.mxu0 %v552
    %715 = vmatprep.subr.bf16.mxu0 0
    %716 = vmatpush1.bf16.msra.mxu0 %v553
    %717 = vmatprep.subr.bf16.mxu0 0
    %718 = vmatpush1.bf16.msra.mxu0 %v554
    %719 = vmatprep.subr.bf16.mxu0 0
    %720 = vmatpush1.bf16.msra.mxu0 %v555
    %721 = vmatprep.subr.bf16.mxu0 0
    %722 = vmatpush1.bf16.msra.mxu0 %v556
    %723 = vmatprep.subr.bf16.mxu0 0
    %724 = vmatpush1.bf16.msra.mxu0 %v557
    %725 = vmatprep.subr.bf16.mxu0 0
    %726 = vmatpush1.bf16.msra.mxu0 %v558
    %727 = vmatprep.mubr.bf16.mxu0 %v131
    %728 = vmatmul.mubr.bf16.gmra.mrb[0].mxu0 %v130
    %v729 = vpop.f32.mrb[0].mxu0
    %v730 = vadd.f32 %v690, %v729
    %v731 = vpop.f32.mrb[0].mxu0
    %v732 = vpop.f32.mrb[0].mxu0
    %v733 = vpop.f32.mrb[0].mxu0
    %734 = vdwg.mxu0
    %735 = vmatprep.subr.bf16.mxu0 0
    %736 = vmatpush1.bf16.msra.mxu0 %v559
    %737 = vmatprep.subr.bf16.mxu0 0
    %738 = vmatpush1.bf16.msra.mxu0 %v560
    %739 = vmatprep.subr.bf16.mxu0 0
    %740 = vmatpush1.bf16.msra.mxu0 %v561
    %741 = vmatprep.subr.bf16.mxu0 0
    %742 = vmatpush1.bf16.msra.mxu0 %v562
    %743 = vmatprep.subr.bf16.mxu0 0
    %744 = vmatpush1.bf16.msra.mxu0 %v563
    %745 = vmatprep.subr.bf16.mxu0 0
    %746 = vmatpush1.bf16.msra.mxu0 %v564
    %747 = vmatprep.subr.bf16.mxu0 0
    %748 = vmatpush1.bf16.msra.mxu0 %v565
    %749 = vmatprep.subr.bf16.mxu0 0
    %750 = vmatpush1.bf16.msra.mxu0 %v566
    %751 = vmatprep.subr.bf16.mxu0 0
    %752 = vmatpush1.bf16.msra.mxu0 %v567
    %753 = vmatprep.subr.bf16.mxu0 0
    %754 = vmatpush1.bf16.msra.mxu0 %v568
    %755 = vmatprep.subr.bf16.mxu0 0
    %756 = vmatpush1.bf16.msra.mxu0 %v569
    %757 = vmatprep.subr.bf16.mxu0 0
    %758 = vmatpush1.bf16.msra.mxu0 %v570
    %759 = vmatprep.subr.bf16.mxu0 0
    %760 = vmatpush1.bf16.msra.mxu0 %v571
    %761 = vmatprep.subr.bf16.mxu0 0
    %762 = vmatpush1.bf16.msra.mxu0 %v572
    %763 = vmatprep.subr.bf16.mxu0 0
    %764 = vmatpush1.bf16.msra.mxu0 %v573
    %765 = vmatprep.subr.bf16.mxu0 0
    %766 = vmatpush1.bf16.msra.mxu0 %v574
    %767 = vmatprep.mubr.bf16.mxu0 %v133
    %768 = vmatmul.mubr.bf16.gmra.mrb[0].mxu0 %v132
    %v769 = vpop.f32.mrb[0].mxu0
    %v770 = vadd.f32 %v730, %v769
    %v771 = vpop.f32.mrb[0].mxu0
    %v772 = vpop.f32.mrb[0].mxu0
    %v773 = vpop.f32.mrb[0].mxu0
    %774 = vdwg.mxu0
    %775 = vmatprep.subr.bf16.mxu0 0
    %776 = vmatpush1.bf16.msra.mxu0 %v575
    %777 = vmatprep.subr.bf16.mxu0 0
    %778 = vmatpush1.bf16.msra.mxu0 %v576
    %779 = vmatprep.subr.bf16.mxu0 0
    %780 = vmatpush1.bf16.msra.mxu0 %v577
    %781 = vmatprep.subr.bf16.mxu0 0
    %782 = vmatpush1.bf16.msra.mxu0 %v578
    %783 = vmatprep.subr.bf16.mxu0 0
    %784 = vmatpush1.bf16.msra.mxu0 %v579
    %785 = vmatprep.subr.bf16.mxu0 0
    %786 = vmatpush1.bf16.msra.mxu0 %v580
    %787 = vmatprep.subr.bf16.mxu0 0
    %788 = vmatpush1.bf16.msra.mxu0 %v581
    %789 = vmatprep.subr.bf16.mxu0 0
    %790 = vmatpush1.bf16.msra.mxu0 %v582
    %791 = vmatprep.subr.bf16.mxu0 0
    %792 = vmatpush1.bf16.msra.mxu0 %v583
    %793 = vmatprep.subr.bf16.mxu0 0
    %794 = vmatpush1.bf16.msra.mxu0 %v584
    %795 = vmatprep.subr.bf16.mxu0 0
    %796 = vmatpush1.bf16.msra.mxu0 %v585
    %797 = vmatprep.subr.bf16.mxu0 0
    %798 = vmatpush1.bf16.msra.mxu0 %v586
    %799 = vmatprep.subr.bf16.mxu0 0
    %800 = vmatpush1.bf16.msra.mxu0 %v587
    %801 = vmatprep.subr.bf16.mxu0 0
    %802 = vmatpush1.bf16.msra.mxu0 %v588
    %803 = vmatprep.subr.bf16.mxu0 0
    %804 = vmatpush1.bf16.msra.mxu0 %v589
    %805 = vmatprep.subr.bf16.mxu0 0
    %806 = vmatpush1.bf16.msra.mxu0 %v590
    %807 = vmatprep.mubr.bf16.mxu0 %v135
    %808 = vmatmul.mubr.bf16.gmra.mrb[0].mxu0 %v134
    %v809 = vpop.f32.mrb[0].mxu0
    %v810 = vadd.f32 %v770, %v809
    %v811 = vpop.f32.mrb[0].mxu0
    %v812 = vpop.f32.mrb[0].mxu0
    %v813 = vpop.f32.mrb[0].mxu0
    %814 = vdwg.mxu0
    %v815 = vlaneseq
    %v816 = vshrl.u32 %v815, 7
    %v817 = vstv %s30
    %v818 = vadd.s32 %v816, %v817
    %v819 = vlaneseq
    %v820 = vand.u32 %v819, 127
    %v821 = vmul.u32 %v818, 2246822507
    %s822 = sadd.s32 %s31, 1
    %s823 = smul.u32 %s822, 2654435769
    %v824 = vstv %s823
    %v825 = vadd.s32 %v821, %v824
    %v826 = vmul.u32 %v820, 3266489909
    %v827 = vadd.s32 %v825, %v826
    %v828 = vshra.s32 %v827, 15
    %v829 = vand.u32 %v828, 131071
    %v830 = vxor.u32 %v827, %v829
    %v831 = vmul.u32 %v830, 3266489909
    %v832 = vand.u32 %v831, 2147483647
    %vm833 = vcmp.ge.s32.totalorder %v832, 429496729
    %vm834 = vcmp.gt.f32.partialorder %v810, 0.0
    %vm835 = vmand %vm833, %vm834
    %v836 = vmul.f32 %v810, 1.25
    %v837 = vsel %vm835, %v836, 0.0
    %v838 = vpack.c.bf16 %v837, %v837
    %v839 = vld [vmem:[%s4] sm:$0xf]
    %v840 = vld [vmem:[%s4 + $0x4] sm:$0xf]
    %v841 = vld [vmem:[%s4 + $0x8] sm:$0xf]
    %v842 = vld [vmem:[%s4 + $0xc] sm:$0xf]
    %v843 = vld [vmem:[%s4 + $0x10] sm:$0xf]
    %v844 = vld [vmem:[%s4 + $0x14] sm:$0xf]
    %v845 = vld [vmem:[%s4 + $0x18] sm:$0xf]
    %v846 = vld [vmem:[%s4 + $0x1c] sm:$0xf]
    %v847 = vld [vmem:[%s4 + $0x20] sm:$0xf]
    %v848 = vld [vmem:[%s4 + $0x24] sm:$0xf]
    %v849 = vld [vmem:[%s4 + $0x28] sm:$0xf]
    %v850 = vld [vmem:[%s4 + $0x2c] sm:$0xf]
    %v851 = vld [vmem:[%s4 + $0x30] sm:$0xf]
    %v852 = vld [vmem:[%s4 + $0x34] sm:$0xf]
    %v853 = vld [vmem:[%s4 + $0x38] sm:$0xf]
    %v854 = vld [vmem:[%s4 + $0x3c] sm:$0xf]
    %v855 = vld [vmem:[%s5] sm:$0x1]
    %v857 = vlaneseq
    %v858 = vshrl.u32 %v857, 7
    %v859 = vsub.s32 0, %v858
    %v860 = vrot.slane %v855, %v859
    %v878 = vunpack.c.l.b16 %v839
    %v879 = vunpack.c.l.b16 %v840
    %v880 = vunpack.c.l.b16 %v841
    %v881 = vunpack.c.l.b16 %v842
    %v882 = vunpack.c.l.b16 %v843
    %v883 = vunpack.c.l.b16 %v844
    %v884 = vunpack.c.l.b16 %v845
    %v885 = vunpack.c.l.b16 %v846
    %v886 = vunpack.c.l.b16 %v847
    %v887 = vunpack.c.l.b16 %v848
    %v888 = vunpack.c.l.b16 %v849
    %v889 = vunpack.c.l.b16 %v850
    %v890 = vunpack.c.l.b16 %v851
    %v891 = vunpack.c.l.b16 %v852
    %v892 = vunpack.c.l.b16 %v853
    %v893 = vunpack.c.l.b16 %v854
    %v894 = vpack.c.b16 %v879, %v878
    %v895 = vpack.c.b16 %v881, %v880
    %v896 = vpack.c.b16 %v883, %v882
    %v897 = vpack.c.b16 %v885, %v884
    %v898 = vpack.c.b16 %v887, %v886
    %v899 = vpack.c.b16 %v889, %v888
    %v900 = vpack.c.b16 %v891, %v890
    %v901 = vpack.c.b16 %v893, %v892
    %910 = vmatprep.subr.bf16.mxu0 0
    %911 = vmatpush1.bf16.msra.mxu0 %v894
    %912 = vmatprep.subr.bf16.mxu0 0
    %913 = vmatpush1.bf16.msra.mxu0 %v895
    %914 = vmatprep.subr.bf16.mxu0 0
    %915 = vmatpush1.bf16.msra.mxu0 %v896
    %916 = vmatprep.subr.bf16.mxu0 0
    %917 = vmatpush1.bf16.msra.mxu0 %v897
    %918 = vmatprep.subr.bf16.mxu0 0
    %919 = vmatpush1.bf16.msra.mxu0 %v898
    %920 = vmatprep.subr.bf16.mxu0 0
    %921 = vmatpush1.bf16.msra.mxu0 %v899
    %922 = vmatprep.subr.bf16.mxu0 0
    %923 = vmatpush1.bf16.msra.mxu0 %v900
    %924 = vmatprep.subr.bf16.mxu0 0
    %925 = vmatpush1.bf16.msra.mxu0 %v901
    %926 = vmatprep.subr.bf16.mxu0 0
    %927 = vmatpush1.bf16.msra.mxu0 0
    %928 = vmatprep.subr.bf16.mxu0 0
    %929 = vmatpush1.bf16.msra.mxu0 0
    %930 = vmatprep.subr.bf16.mxu0 0
    %931 = vmatpush1.bf16.msra.mxu0 0
    %932 = vmatprep.subr.bf16.mxu0 0
    %933 = vmatpush1.bf16.msra.mxu0 0
    %934 = vmatprep.subr.bf16.mxu0 0
    %935 = vmatpush1.bf16.msra.mxu0 0
    %936 = vmatprep.subr.bf16.mxu0 0
    %937 = vmatpush1.bf16.msra.mxu0 0
    %938 = vmatprep.subr.bf16.mxu0 0
    %939 = vmatpush1.bf16.msra.mxu0 0
    %940 = vmatprep.subr.bf16.mxu0 0
    %941 = vmatpush1.bf16.msra.mxu0 0
    %942 = vmatprep.mubr.bf16.mxu0 0
    %943 = vmatmul.mubr.bf16.gmra.mrb[0].mxu0 %v838
    %v944 = vpop.f32.mrb[0].mxu0
    %v945 = vadd.f32 %v860, %v944
    %v946 = vpop.f32.mrb[0].mxu0
    %v947 = vpop.f32.mrb[0].mxu0
    %v948 = vpop.f32.mrb[0].mxu0
    %949 = vdwg.mxu0
    %s950 = sadd.s32 %s31, 2
    %s951 = smul.u32 %s950, 2654435769
    %v952 = vstv %s951
    %v953 = vadd.s32 %v821, %v952
    %v954 = vadd.s32 %v953, %v826
    %v955 = vshra.s32 %v954, 15
    %v956 = vand.u32 %v955, 131071
    %v957 = vxor.u32 %v954, %v956
    %v958 = vmul.u32 %v957, 3266489909
    %v959 = vand.u32 %v958, 2147483647
    %vm960 = vcmp.ge.s32.totalorder %v959, 429496729
    %vm961 = vcmp.gt.f32.partialorder %v945, 0.0
    %vm962 = vmand %vm960, %vm961
    %v963 = vmul.f32 %v945, 1.25
    %v964 = vsel %vm962, %v963, 0.0
    %v965 = vpack.c.bf16 %v964, %v964
    %v966 = vld [vmem:[%s6] sm:$0xf]
    %v967 = vld [vmem:[%s6 + $0x4] sm:$0xf]
    %v968 = vld [vmem:[%s6 + $0x8] sm:$0xf]
    %v969 = vld [vmem:[%s6 + $0xc] sm:$0xf]
    %v970 = vld [vmem:[%s6 + $0x10] sm:$0xf]
    %v971 = vld [vmem:[%s6 + $0x14] sm:$0xf]
    %v972 = vld [vmem:[%s6 + $0x18] sm:$0xf]
    %v973 = vld [vmem:[%s6 + $0x1c] sm:$0xf]
    %v974 = vld [vmem:[%s6 + $0x20] sm:$0xf]
    %v975 = vld [vmem:[%s6 + $0x24] sm:$0xf]
    %v976 = vld [vmem:[%s6 + $0x28] sm:$0xf]
    %v977 = vld [vmem:[%s6 + $0x2c] sm:$0xf]
    %v978 = vld [vmem:[%s6 + $0x30] sm:$0xf]
    %v979 = vld [vmem:[%s6 + $0x34] sm:$0xf]
    %v980 = vld [vmem:[%s6 + $0x38] sm:$0xf]
    %v981 = vld [vmem:[%s6 + $0x3c] sm:$0xf]
    %v982 = vld [vmem:[%s7] sm:$0x1]
    %v984 = vlaneseq
    %v985 = vshrl.u32 %v984, 7
    %v986 = vsub.s32 0, %v985
    %v987 = vrot.slane %v982, %v986
    %v1005 = vunpack.c.l.b16 %v966
    %v1006 = vunpack.c.l.b16 %v967
    %v1007 = vunpack.c.l.b16 %v968
    %v1008 = vunpack.c.l.b16 %v969
    %v1009 = vunpack.c.l.b16 %v970
    %v1010 = vunpack.c.l.b16 %v971
    %v1011 = vunpack.c.l.b16 %v972
    %v1012 = vunpack.c.l.b16 %v973
    %v1013 = vunpack.c.l.b16 %v974
    %v1014 = vunpack.c.l.b16 %v975
    %v1015 = vunpack.c.l.b16 %v976
    %v1016 = vunpack.c.l.b16 %v977
    %v1017 = vunpack.c.l.b16 %v978
    %v1018 = vunpack.c.l.b16 %v979
    %v1019 = vunpack.c.l.b16 %v980
    %v1020 = vunpack.c.l.b16 %v981
    %v1021 = vpack.c.b16 %v1006, %v1005
    %v1022 = vpack.c.b16 %v1008, %v1007
    %v1023 = vpack.c.b16 %v1010, %v1009
    %v1024 = vpack.c.b16 %v1012, %v1011
    %v1025 = vpack.c.b16 %v1014, %v1013
    %v1026 = vpack.c.b16 %v1016, %v1015
    %v1027 = vpack.c.b16 %v1018, %v1017
    %v1028 = vpack.c.b16 %v1020, %v1019
    %1037 = vmatprep.subr.bf16.mxu0 0
    %1038 = vmatpush1.bf16.msra.mxu0 %v1021
    %1039 = vmatprep.subr.bf16.mxu0 0
    %1040 = vmatpush1.bf16.msra.mxu0 %v1022
    %1041 = vmatprep.subr.bf16.mxu0 0
    %1042 = vmatpush1.bf16.msra.mxu0 %v1023
    %1043 = vmatprep.subr.bf16.mxu0 0
    %1044 = vmatpush1.bf16.msra.mxu0 %v1024
    %1045 = vmatprep.subr.bf16.mxu0 0
    %1046 = vmatpush1.bf16.msra.mxu0 %v1025
    %1047 = vmatprep.subr.bf16.mxu0 0
    %1048 = vmatpush1.bf16.msra.mxu0 %v1026
    %1049 = vmatprep.subr.bf16.mxu0 0
    %1050 = vmatpush1.bf16.msra.mxu0 %v1027
    %1051 = vmatprep.subr.bf16.mxu0 0
    %1052 = vmatpush1.bf16.msra.mxu0 %v1028
    %1053 = vmatprep.subr.bf16.mxu0 0
    %1054 = vmatpush1.bf16.msra.mxu0 0
    %1055 = vmatprep.subr.bf16.mxu0 0
    %1056 = vmatpush1.bf16.msra.mxu0 0
    %1057 = vmatprep.subr.bf16.mxu0 0
    %1058 = vmatpush1.bf16.msra.mxu0 0
    %1059 = vmatprep.subr.bf16.mxu0 0
    %1060 = vmatpush1.bf16.msra.mxu0 0
    %1061 = vmatprep.subr.bf16.mxu0 0
    %1062 = vmatpush1.bf16.msra.mxu0 0
    %1063 = vmatprep.subr.bf16.mxu0 0
    %1064 = vmatpush1.bf16.msra.mxu0 0
    %1065 = vmatprep.subr.bf16.mxu0 0
    %1066 = vmatpush1.bf16.msra.mxu0 0
    %1067 = vmatprep.subr.bf16.mxu0 0
    %1068 = vmatpush1.bf16.msra.mxu0 0
    %1069 = vmatprep.mubr.bf16.mxu0 0
    %1070 = vmatmul.mubr.bf16.gmra.mrb[0].mxu0 %v965
    %v1071 = vpop.f32.mrb[0].mxu0
    %v1072 = vadd.f32 %v987, %v1071
    %v1073 = vpop.f32.mrb[0].mxu0
    %v1074 = vpop.f32.mrb[0].mxu0
    %v1075 = vpop.f32.mrb[0].mxu0
    %1076 = vdwg.mxu0
    %1077 = vst [vmem:[#allocation4] sm:$0xff] %v1072
    // Predicated region
    $region30: #{mlp_dropout_forward.1} parent=1 // pred_check
      _
    $region31: #{mlp_dropout_forward.1} parent=1 // pred_check_branch
      %1079 = sbr.rel (0) target = $region33
    $region32: #{mlp_dropout_forward.1} parent=1 // pred_region
      %s1081 = ssub.s32 128, 32
      %1082 = vsyncadd [#allocation5], %s1081
      %s1083 = sshll.u32 [#allocation4], 4
      %s1084 = int_to_ptr.vmem [resolvable:$true] %s1083
      %1089 = dma.vmem_to_hbm [thread:$0]  %s1084, 32, %s8, [#allocation5], 32, 32, 2
    $region33: #{mlp_dropout_forward.1} parent=1 // pred_fallthru
      _
    // Predicated region
    $region34: #{mlp_dropout_forward.1} parent=1 // pred_check
      _
    $region35: #{mlp_dropout_forward.1} parent=1 // pred_check_branch
      %1091 = sbr.rel (0) target = $region37
    $region36: #{mlp_dropout_forward.1} parent=1 // pred_region
      %1092 = dma.done [#allocation5], 128
    $region37: #{mlp_dropout_forward.1} parent=1 // pred_fallthru
      _
    %1093 = vsyncpa [#allocation5], 1

</llo_original>
